<compile_context>
chip_gen: v7x
topology: tpu7x:2x2x1
jax: 0.10.0
libtpu: 0.0.40
codegen_flags: <defaults>
</compile_context>

<pallas_src>
import functools

import jax
import jax.numpy as jnp
import numpy as np
from jax.experimental import pallas as pl
from jax.experimental.pallas import tpu as pltpu


def _col_sums_kernel(p_ref, t_ref, sq_ref, bce_ref, *,
                     tile_rows, half_blocks, num_rows):
    """Accumulate per-lane sums of (p - t)^2 and BCE-with-logits elements."""
    h = pl.program_id(0)          # half / core index ("parallel")
    k = pl.program_id(1)          # row-block index within the half ("arbitrary")

    @pl.when(k == 0)
    def _init():
        sq_ref[...] = jnp.zeros_like(sq_ref)
        bce_ref[...] = jnp.zeros_like(bce_ref)

    p = p_ref[...].astype(jnp.float32)
    t = t_ref[...].astype(jnp.float32)

    # Logical (unclamped) row range of this block; rows >= num_rows belong to
    # the padded tail of a partial edge block or to a clamped duplicate block
    # and must contribute nothing.
    row0 = (h * half_blocks + k) * tile_rows
    rows = row0 + jax.lax.broadcasted_iota(jnp.int32, (tile_rows, 1), 0)
    valid = rows < num_rows                                   # (tile_rows, 1)

    diff = p - t
    sq = jnp.where(valid, diff * diff, 0.0)
    # BCEWithLogitsLoss (stable): max(x, 0) - x*z + log1p(exp(-|x|))
    bce = jnp.where(
        valid,
        jnp.maximum(p, 0.0) - p * t + jnp.log1p(jnp.exp(-jnp.abs(p))),
        0.0)
    # TODO(synk): group columns into contiguous bin/cont slabs so the EUP
    # transcendentals (exp/log1p) are only evaluated on the binary columns.

    sq_ref[...] += jnp.sum(sq, axis=0)[None, None, :]
    bce_ref[...] += jnp.sum(bce, axis=0)[None, None, :]


def _column_sums(p, t, *, tile_rows, vmem_limit_bytes=32 * 1024 * 1024):
    """Per-column sums over rows of (p-t)^2 and BCE elements -> two (C,) f32."""
    R, C = p.shape
    # Row tile: largest requested tile that fits, a multiple of 8 (or the full
    # extent).  2 inputs x 2 pipeline buffers x (tile_rows x C x 4B) stays far
    # below the scoped VMEM budget of every generation (v5e .. v7x) at the
    # default tile_rows; the limit is set explicitly anyway.
    tn = min(tile_rows, R)
    if tn < R:
        tn = max(8, (tn // 8) * 8)
    blocks_total = -(-R // tn)
    num_halves = 2 if blocks_total >= 2 else 1     # engage both TCs on v7x
    half_blocks = -(-blocks_total // num_halves)
    last_block = blocks_total - 1

    def row_map(h, k):
        # Clamp so a fully out-of-range block (odd blocks_total) re-reads the
        # last real block; the kernel masks it out via the *unclamped* index.
        return (jnp.minimum(h * half_blocks + k, last_block), 0)

    kernel = functools.partial(_col_sums_kernel, tile_rows=tn,
                               half_blocks=half_blocks, num_rows=R)

    sq, bce = pl.pallas_call(
        kernel,
        out_shape=(jax.ShapeDtypeStruct((num_halves, 1, C), jnp.float32),
                   jax.ShapeDtypeStruct((num_halves, 1, C), jnp.float32)),
        grid=(num_halves, half_blocks),
        in_specs=[pl.BlockSpec((tn, C), row_map),
                  pl.BlockSpec((tn, C), row_map)],
        out_specs=(pl.BlockSpec((1, 1, C), lambda h, k: (h, 0, 0)),
                   pl.BlockSpec((1, 1, C), lambda h, k: (h, 0, 0))),
        compiler_params=pltpu.CompilerParams(
            dimension_semantics=("parallel", "arbitrary"),
            vmem_limit_bytes=vmem_limit_bytes),
    )(p, t)
    return jnp.sum(sq, axis=(0, 1)), jnp.sum(bce, axis=(0, 1))


def mixed_loss_pallas(pred, target, shuffle_ordering, var_types,
                      orig_var_name_ordering, causal_ordering, *,
                      tile_rows=2048):
    """Reproduces MixedLoss.forward. Returns (total_loss, loss_tracking dict)."""
    N, V = pred.shape
    shuf_np = np.asarray(shuffle_ordering, dtype=np.int32)
    shuf = jnp.asarray(shuf_np)

    # PyTorch loop uses, for variable i:
    #   p = pred[:, shuffle[shuffle[i]]],  t = target[:, shuffle[i]].
    # With j = shuffle[i], the per-column loss L[j] is computed between
    # pred[:, shuffle[j]] and target[:, j]; variable i then reads L[shuffle[i]].
    # => ONE N x V gather (pred); target stays un-permuted; the remaining
    # permutation acts only on (V,)-sized vectors.
    p_cols = jnp.take(pred, shuf, axis=1)      # native dtype, no f32 pre-cast
    t_cols = target

    # Lane-dense packing: map the V columns onto the 128 vreg lanes when possible.
    if V < 128 and 128 % V == 0 and N >= 128 // V:
        group = 128 // V                        # original rows per packed row
        n_main = (N // group) * group
        R, C = n_main // group, 128
        p_main = p_cols[:n_main].reshape(R, C)  # free row-major reshape
        t_main = t_cols[:n_main].reshape(R, C)
    else:
        group, n_main = 1, N
        R, C = N, V
        p_main, t_main = p_cols, t_cols

    sq_col, bce_col = _column_sums(p_main, t_main, tile_rows=tile_rows)
    if group > 1:
        sq_col = jnp.sum(sq_col.reshape(group, V), axis=0)
        bce_col = jnp.sum(bce_col.reshape(group, V), axis=0)

    # Fold in the (< 128//V) leftover rows with a trivial plain-JAX reduction.
    if n_main < N:
        p_rem = p_cols[n_main:].astype(jnp.float32)
        t_rem = t_cols[n_main:].astype(jnp.float32)
        sq_col = sq_col + jnp.sum((p_rem - t_rem) ** 2, axis=0)
        bce_col = bce_col + jnp.sum(
            jnp.maximum(p_rem, 0.0) - p_rem * t_rem
            + jnp.log1p(jnp.exp(-jnp.abs(p_rem))), axis=0)

    # Per-variable masks in the original variable ordering (static numpy).
    bin_mask = np.zeros((V,), np.float32)
    inc_mask = np.zeros((V,), np.float32)
    for i, name in enumerate(orig_var_name_ordering):
        if var_types[name] == 'bin':
            bin_mask[i] = 1.0
        if causal_ordering[name] != 0:
            inc_mask[i] = 1.0

    # Variable i reads column shuffle[i]; select loss type; mean over full N.
    sq_var = jnp.take(sq_col, shuf)
    bce_var = jnp.take(bce_col, shuf)
    per_var = jnp.where(jnp.asarray(bin_mask) > 0.5, bce_var, sq_var) / jnp.float32(N)
    total = jnp.sum(per_var * jnp.asarray(inc_mask))

    # Single device->host transfer at the end, matching the module's .item()
    # semantics for loss_tracking.  (In a training loop, return `per_var` and
    # only convert when logging.)
    per_var_host = np.asarray(jax.device_get(per_var))
    loss_tracking = {name: float(per_var_host[i])
                     for i, name in enumerate(orig_var_name_ordering)
                     if causal_ordering[name] != 0}
    return total, loss_tracking


def _reference(pred, target, shuffle_ordering, var_types,
               orig_var_name_ordering, causal_ordering):
    """NumPy reference mirroring the PyTorch loop."""
    pred = np.asarray(pred, dtype=np.float64)
    target = np.asarray(target, dtype=np.float64)
    shuffle = list(shuffle_ordering)
    pred_s = pred[:, shuffle]
    target_s = target[:, shuffle]
    total = 0.0
    tracking = {}
    for i, name in enumerate(orig_var_name_ordering):
        if causal_ordering[name] != 0:
            idx = shuffle[i]
            p = pred_s[:, idx]
            t = target_s[:, i]
            if var_types[name] == 'cont':
                loss = np.mean((p - t) ** 2)
            else:  # 'bin'
                loss = np.mean(np.maximum(p, 0.0) - p * t + np.log1p(np.exp(-np.abs(p))))
            tracking[name] = float(loss)
            total += loss
    return total, tracking


def _make_config(V, seed=0):
    rs = np.random.RandomState(seed)
    names = [f"v{i}" for i in range(V)]
    var_types = {n: ("bin" if rs.rand() < 0.5 else "cont") for n in names}
    causal = {n: int(rs.randint(0, 3)) for n in names}
    causal[names[0]] = 1                       # keep at least one variable included
    shuffle = [int(x) for x in rs.permutation(V)]
    return names, var_types, causal, shuffle


def _run_case(case, N, V, names, var_types, causal, shuffle, tile_rows, key):
    kp, kt = jax.random.split(key)
    pred = jax.random.normal(kp, (N, V), dtype=jnp.float32)
    target = jax.random.uniform(kt, (N, V), dtype=jnp.float32)  # valid BCE targets
    total, tracking = mixed_loss_pallas(
        pred, target, shuffle, var_types, names, causal, tile_rows=tile_rows)
    total = jax.block_until_ready(total)
    ref_total, ref_tracking = _reference(pred, target, shuffle, var_types, names, causal)
    assert np.allclose(float(total), ref_total, rtol=1e-3, atol=1e-5), \
        (case, float(total), ref_total)
    assert set(tracking) == set(ref_tracking), (case, tracking, ref_tracking)
    for k in ref_tracking:
        assert np.allclose(tracking[k], ref_tracking[k], rtol=1e-3, atol=1e-5), \
            (case, k, tracking[k], ref_tracking[k])


if __name__ == "__main__":
    key = jax.random.PRNGKey(0)
    k1, k2, k3 = jax.random.split(key, 3)

    # Case 1: canonical config; lane-dense packed path, single row block, plus
    # a leftover-row tail (264 = 8*32 + 8).
    names1 = ["age", "sex", "bmi", "label"]
    types1 = {"age": "cont", "sex": "bin", "bmi": "cont", "label": "bin"}
    causal1 = {"age": 0, "sex": 1, "bmi": 2, "label": 1}
    shuffle1 = [2, 0, 3, 1]
    _run_case("packed_single_block", 264, 4, names1, types1, causal1, shuffle1, 2048, k1)

    # Case 2: packed path with multiple row blocks, the 2-way "parallel" split
    # and a partial last block (tiny tile_rows just to exercise the pipeline).
    names2, types2, causal2, shuffle2 = _make_config(4, seed=1)
    _run_case("packed_multi_block", 1000, 4, names2, types2, causal2, shuffle2, 8, k2)

    # Case 3: V does not divide 128 -> simple narrow-lane fallback path.
    names3, types3, causal3, shuffle3 = _make_config(5, seed=2)
    _run_case("fallback_narrow_lanes", 50, 5, names3, types3, causal3, shuffle3, 16, k3)

    print("KERNEL_OK")
</pallas_src>

<mosaic_0001>
module attributes {stable_mosaic.version = 11 : i64} {
  func.func @_col_sums_kernel(%arg0: i32, %arg1: i32, %arg2: memref<8x128xf32, #tpu.memory_space<vmem>>, %arg3: memref<8x128xf32, #tpu.memory_space<vmem>>, %arg4: memref<1x1x128xf32, #tpu.memory_space<vmem>>, %arg5: memref<1x1x128xf32, #tpu.memory_space<vmem>>) attributes {dimension_semantics = [#tpu.dimension_semantics<parallel>, #tpu.dimension_semantics<arbitrary>], iteration_bounds = array<i64: 1, 1>, scalar_prefetch = 0 : i64, scratch_operands = 0 : i64, tpu.core_type = #tpu.core_type<tc>, window_params = [{transform_indices = @transform_0, window_bounds = array<i64: 8, 128>}, {transform_indices = @transform_1, window_bounds = array<i64: 8, 128>}, {transform_indices = @transform_2, window_bounds = array<i64: 1, 1, 128>}, {transform_indices = @transform_3, window_bounds = array<i64: 1, 1, 128>}]} {
    %c0_i32 = arith.constant 0 : i32
    %0 = arith.cmpi eq, %arg1, %c0_i32 : i32
    %1 = arith.extui %0 : i1 to i32
    %c0_i32_0 = arith.constant 0 : i32
    %2 = arith.cmpi ne, %1, %c0_i32_0 : i32
    scf.if %2 {
      %cst_22 = arith.constant 0.000000e+00 : f32
      %43 = vector.broadcast %cst_22 : f32 to vector<1x1x128xf32>
      %c0_23 = arith.constant 0 : index
      %c0_24 = arith.constant 0 : index
      %c0_25 = arith.constant 0 : index
      %44 = vector.load %arg4[%c0_23, %c0_24, %c0_25] : memref<1x1x128xf32, #tpu.memory_space<vmem>>, vector<1x1x128xf32>
      tpu.vector_store %arg4[%c0_23, %c0_24, %c0_25], %43 {strides = array<i32>} : memref<1x1x128xf32, #tpu.memory_space<vmem>>, vector<1x1x128xf32>,
      %cst_26 = arith.constant 0.000000e+00 : f32
      %45 = vector.broadcast %cst_26 : f32 to vector<1x1x128xf32>
      %c0_27 = arith.constant 0 : index
      %c0_28 = arith.constant 0 : index
      %c0_29 = arith.constant 0 : index
      %46 = vector.load %arg5[%c0_27, %c0_28, %c0_29] : memref<1x1x128xf32, #tpu.memory_space<vmem>>, vector<1x1x128xf32>
      tpu.vector_store %arg5[%c0_27, %c0_28, %c0_29], %45 {strides = array<i32>} : memref<1x1x128xf32, #tpu.memory_space<vmem>>, vector<1x1x128xf32>,
    } else {
    }
    %c0 = arith.constant 0 : index
    %c0_1 = arith.constant 0 : index
    %3 = vector.load %arg2[%c0, %c0_1] : memref<8x128xf32, #tpu.memory_space<vmem>>, vector<8x128xf32>
    %c0_2 = arith.constant 0 : index
    %c0_3 = arith.constant 0 : index
    %4 = vector.load %arg3[%c0_2, %c0_3] : memref<8x128xf32, #tpu.memory_space<vmem>>, vector<8x128xf32>
    %c1_i32 = arith.constant 1 : i32
    %5 = arith.muli %arg0, %c1_i32 : i32
    %6 = arith.addi %5, %arg1 : i32
    %c8_i32 = arith.constant 8 : i32
    %7 = arith.muli %6, %c8_i32 : i32
    %8 = tpu.iota {dimensions = array<i32: 0>} : vector<8x1xi32>
    %9 = vector.broadcast %7 : i32 to vector<8x1xi32>
    %10 = arith.addi %9, %8 : vector<8x1xi32>
    %c8_i32_4 = arith.constant 8 : i32
    %11 = vector.broadcast %c8_i32_4 : i32 to vector<8x1xi32>
    %12 = arith.cmpi slt, %10, %11 : vector<8x1xi32>
    %13 = arith.subf %3, %4 : vector<8x128xf32>
    %14 = arith.mulf %13, %13 : vector<8x128xf32>
    %cst = arith.constant 0.000000e+00 : f32
    %15 = vector.shape_cast %12 : vector<8x1xi1> to vector<8x1xi1>
    %16 = vector.broadcast %15 : vector<8x1xi1> to vector<8x128xi1>
    %17 = vector.broadcast %cst : f32 to vector<8x128xf32>
    %18 = arith.select %16, %14, %17 : vector<8x128xi1>, vector<8x128xf32>
    %cst_5 = arith.constant 0.000000e+00 : f32
    %19 = vector.broadcast %cst_5 : f32 to vector<8x128xf32>
    %20 = arith.maximumf %3, %19 : vector<8x128xf32>
    %21 = arith.mulf %3, %4 : vector<8x128xf32>
    %22 = arith.subf %20, %21 : vector<8x128xf32>
    %23 = math.absf %3 : vector<8x128xf32>
    %cst_6 = arith.constant 0.000000e+00 : f32
    %24 = vector.broadcast %cst_6 : f32 to vector<8x128xf32>
    %25 = arith.subf %24, %23 : vector<8x128xf32>
    %26 = math.exp %25 : vector<8x128xf32>
    %27 = math.log1p %26 : vector<8x128xf32>
    %28 = arith.addf %22, %27 : vector<8x128xf32>
    %cst_7 = arith.constant 0.000000e+00 : f32
    %29 = vector.shape_cast %12 : vector<8x1xi1> to vector<8x1xi1>
    %30 = vector.broadcast %29 : vector<8x1xi1> to vector<8x128xi1>
    %31 = vector.broadcast %cst_7 : f32 to vector<8x128xf32>
    %32 = arith.select %30, %28, %31 : vector<8x128xi1>, vector<8x128xf32>
    %c0_8 = arith.constant 0 : index
    %c0_9 = arith.constant 0 : index
    %c0_10 = arith.constant 0 : index
    %33 = vector.load %arg4[%c0_8, %c0_9, %c0_10] : memref<1x1x128xf32, #tpu.memory_space<vmem>>, vector<1x1x128xf32>
    %cst_11 = arith.constant dense<0.000000e+00> : vector<128xf32>
    %34 = vector.multi_reduction <add>, %18, %cst_11 [0] : vector<8x128xf32> to vector<128xf32>
    %35 = vector.shape_cast %34 : vector<128xf32> to vector<1x1x128xf32>
    %36 = arith.addf %33, %35 : vector<1x1x128xf32>
    %c0_12 = arith.constant 0 : index
    %c0_13 = arith.constant 0 : index
    %c0_14 = arith.constant 0 : index
    %37 = vector.load %arg4[%c0_12, %c0_13, %c0_14] : memref<1x1x128xf32, #tpu.memory_space<vmem>>, vector<1x1x128xf32>
    tpu.vector_store %arg4[%c0_12, %c0_13, %c0_14], %36 {strides = array<i32>} : memref<1x1x128xf32, #tpu.memory_space<vmem>>, vector<1x1x128xf32>,
    %c0_15 = arith.constant 0 : index
    %c0_16 = arith.constant 0 : index
    %c0_17 = arith.constant 0 : index
    %38 = vector.load %arg5[%c0_15, %c0_16, %c0_17] : memref<1x1x128xf32, #tpu.memory_space<vmem>>, vector<1x1x128xf32>
    %cst_18 = arith.constant dense<0.000000e+00> : vector<128xf32>
    %39 = vector.multi_reduction <add>, %32, %cst_18 [0] : vector<8x128xf32> to vector<128xf32>
    %40 = vector.shape_cast %39 : vector<128xf32> to vector<1x1x128xf32>
    %41 = arith.addf %38, %40 : vector<1x1x128xf32>
    %c0_19 = arith.constant 0 : index
    %c0_20 = arith.constant 0 : index
    %c0_21 = arith.constant 0 : index
    %42 = vector.load %arg5[%c0_19, %c0_20, %c0_21] : memref<1x1x128xf32, #tpu.memory_space<vmem>>, vector<1x1x128xf32>
    tpu.vector_store %arg5[%c0_19, %c0_20, %c0_21], %41 {strides = array<i32>} : memref<1x1x128xf32, #tpu.memory_space<vmem>>, vector<1x1x128xf32>,
    return
  }
  func.func @transform_0(%arg0: i32, %arg1: i32) -> (i32, i32) {
    %c1_i32 = arith.constant 1 : i32
    %0 = arith.muli %arg0, %c1_i32 : i32
    %1 = arith.addi %0, %arg1 : i32
    %c0_i32 = arith.constant 0 : i32
    %2 = arith.minsi %1, %c0_i32 : i32
    %c0_i32_0 = arith.constant 0 : i32
    %c0_i32_1 = arith.constant 0 : i32
    return %2, %c0_i32_0 : i32, i32
  }
  func.func @transform_1(%arg0: i32, %arg1: i32) -> (i32, i32) {
    %c1_i32 = arith.constant 1 : i32
    %0 = arith.muli %arg0, %c1_i32 : i32
    %1 = arith.addi %0, %arg1 : i32
    %c0_i32 = arith.constant 0 : i32
    %2 = arith.minsi %1, %c0_i32 : i32
    %c0_i32_0 = arith.constant 0 : i32
    %c0_i32_1 = arith.constant 0 : i32
    return %2, %c0_i32_0 : i32, i32
  }
  func.func @transform_2(%arg0: i32, %arg1: i32) -> (i32, i32, i32) {
    %c0_i32 = arith.constant 0 : i32
    %c0_i32_0 = arith.constant 0 : i32
    %c0_i32_1 = arith.constant 0 : i32
    return %arg0, %c0_i32, %c0_i32_0 : i32, i32, i32
  }
  func.func @transform_3(%arg0: i32, %arg1: i32) -> (i32, i32, i32) {
    %c0_i32 = arith.constant 0 : i32
    %c0_i32_0 = arith.constant 0 : i32
    %c0_i32_1 = arith.constant 0 : i32
    return %arg0, %c0_i32, %c0_i32_0 : i32, i32, i32
  }
}

</mosaic_0001>

<llo_original>
// kernel: tpu_custom_call.1
$region0: #{tpu_custom_call.1}
  #allocation0 [shape = 'u32[]', space=smem, size = 0x4, offset = 0x4, fixed_abs, tag = 'smem constant byte address 0x4 - core index']
  #allocation1 [shape = 'u32[144,128]{1,0:T(1,128)}', space=vmem, size = 0x12000, scoped, tag = 'internal scratch']
  %s0 = inlined_call_operand.hbm [shape: f32[8,128], index: 0, kind: input, shape index: {}]
  %s1 = inlined_call_operand.hbm [shape: f32[8,128], index: 1, kind: input, shape index: {}]
  %s2 = inlined_call_operand.hbm [shape: f32[1,1,128], index: 2, kind: output, shape index: {0}]
  %s3 = inlined_call_operand.hbm [shape: f32[1,1,128], index: 3, kind: output, shape index: {1}]
  %4 = xla_tuple %s2, %s3
  %s5 = sld [smem:[#allocation0]]
  $region38: #{tpu_custom_call.1} parent=0
    _
  %s7 = ssub.s32 1, %s5
  %s8 = scalar_select 0, %s7, %s5
  $region1: #{tpu_custom_call.1} parent=0
    #allocation2 [shape = 'u8[4096]{0}', space=vmem, size = 0x1000, scoped, tag = 'input window, operand 0, single buffered']
    #allocation3 [shape = 's32[1]{0}', space=sflag, size = 0x4, scoped, tag = 'scoped memory for tpu_custom_call.1']
    #allocation4 [shape = 's32[1]{0}', space=sflag, size = 0x4, scoped, tag = 'scoped memory for tpu_custom_call.1']
    #allocation5 [shape = 'u8[4096]{0}', space=vmem, size = 0x1000, scoped, tag = 'input window, operand 1, single buffered']
    #allocation6 [shape = 's32[1]{0}', space=sflag, size = 0x4, scoped, tag = 'scoped memory for tpu_custom_call.1']
    #allocation7 [shape = 'u8[512]{0}', space=vmem, size = 0x400, scoped, tag = 'output window, operand 0, single buffered']
    #allocation8 [shape = 'u8[512]{0}', space=vmem, size = 0x400, scoped, tag = 'output window, operand 1, single buffered']
    #allocation9 [shape = 's32[1]{0}', space=sflag, size = 0x4, scoped, tag = 'scoped memory for tpu_custom_call.1']
    %9 = vsyncpa [#allocation3], 0
    %10 = vsyncpa [#allocation6], 0
    %11 = vsyncpa [#allocation4], 0
    %12 = vsyncpa [#allocation9], 0
    // Predicated region
    $region2: #{tpu_custom_call.1} parent=1 // pred_check
      _
    $region3: #{tpu_custom_call.1} parent=1 // pred_check_branch
      %14 = sbr.rel (0) target = $region5
    $region4: #{tpu_custom_call.1} parent=1 // pred_region
      %s15 = sadd.s32 0, 0
      %p16 = scmp.lt.s32.totalorder %s15, 0
      %s17 = scalar_select %p16, %s15, 0
      %s19 = ssub.s32 128, 128
      %20 = vsyncadd [#allocation3], %s19
      %s21 = smul.addr %s17, 128
      %s22 = scalar_lea.hbm %s0, %s21
      %s24 = sshll.u32 [#allocation2], 4
      %s25 = int_to_ptr.vmem [resolvable:$true] %s24
      %27 = dma.hbm_to_vmem [thread:$0]  %s22, 128, %s25, [#allocation3]
    $region5: #{tpu_custom_call.1} parent=1 // pred_fallthru
      _
    // Predicated region
    $region6: #{tpu_custom_call.1} parent=1 // pred_check
      _
    $region7: #{tpu_custom_call.1} parent=1 // pred_check_branch
      %29 = sbr.rel (0) target = $region9
    $region8: #{tpu_custom_call.1} parent=1 // pred_region
      %s30 = sadd.s32 0, 0
      %p31 = scmp.lt.s32.totalorder %s30, 0
      %s32 = scalar_select %p31, %s30, 0
      %s34 = ssub.s32 128, 128
      %35 = vsyncadd [#allocation6], %s34
      %s36 = smul.addr %s32, 128
      %s37 = scalar_lea.hbm %s1, %s36
      %s39 = sshll.u32 [#allocation5], 4
      %s40 = int_to_ptr.vmem [resolvable:$true] %s39
      %42 = dma.hbm_to_vmem [thread:$0]  %s37, 128, %s40, [#allocation6]
    $region9: #{tpu_custom_call.1} parent=1 // pred_fallthru
      _
    // Predicated region
    $region10: #{tpu_custom_call.1} parent=1 // pred_check
      _
    $region11: #{tpu_custom_call.1} parent=1 // pred_check_branch
      %44 = sbr.rel (0) target = $region13
    $region12: #{tpu_custom_call.1} parent=1 // pred_region
      %45 = dma.done [#allocation3], 128
    $region13: #{tpu_custom_call.1} parent=1 // pred_fallthru
      _
    // Predicated region
    $region14: #{tpu_custom_call.1} parent=1 // pred_check
      _
    $region15: #{tpu_custom_call.1} parent=1 // pred_check_branch
      %47 = sbr.rel (0) target = $region17
    $region16: #{tpu_custom_call.1} parent=1 // pred_region
      %48 = dma.done [#allocation6], 128
    $region17: #{tpu_custom_call.1} parent=1 // pred_fallthru
      _
    %s49 = sadd.s32 0, 0
    %p50 = scmp.lt.s32.totalorder %s49, 0
    %s51 = scalar_select %p50, %s49, 0
    %s52 = sadd.s32 0, 0
    %p53 = scmp.lt.s32.totalorder %s52, 0
    %s54 = scalar_select %p53, %s52, 0
    %p55 = scmp.eq.s32.totalorder 0, 0
    // Predicated region
    $region18: #{tpu_custom_call.1} parent=1 // pred_check
      %p56 = pneg %p55
    $region19: #{tpu_custom_call.1} parent=1 // pred_check_branch
      %58 = sbr.rel (%p56) target = $region21
    $region20: #{tpu_custom_call.1} parent=1 // pred_region
      %59 = vst [vmem:[#allocation7] sm:$0x1] 0.0
      %60 = vst [vmem:[#allocation8] sm:$0x1] 0.0
    $region21: #{tpu_custom_call.1} parent=1 // pred_fallthru
      _
    %v61 = vld [vmem:[#allocation2] sm:$0xff]
    %v62 = vld [vmem:[#allocation5] sm:$0xff]
    %s63 = sadd.s32 0, 0
    %s64 = smul.u32 %s63, 8
    %v65 = vlaneseq
    %v66 = vshrl.u32 %v65, 7
    %v67 = vstv %s64
    %v68 = vadd.s32 %v67, %v66
    %vm69 = vcmp.lt.s32.totalorder %v68, 8
    %v70 = vsub.f32 %v61, %v62
    %v71 = vmul.f32 %v70, %v70
    %v72 = vsel %vm69, 1, 0
    %vm73 = vcmp.eq.s32.totalorder %v72, 1
    %v74 = vsel %vm73, %v71, 0.0
    %v75 = vmax.f32 %v61, 0.0
    %v76 = vmul.f32 %v61, %v62
    %v77 = vsub.f32 %v75, %v76
    %v78 = vand.u32 2147483647, %v61
    %v79 = vsub.f32 0.0, %v78
    %v80 = vmul.f32 %v79, 1.442695
    %v81 = vpow.pop %v80
    %v82 = vadd.f32 %v81, 1.0
    %v83 = vlog2.pop %v82
    %v84 = vmul.f32 %v83, 0.6931472
    %v85 = vmul.f32 -0.5, %v81
    %v86 = vadd.f32 %v85, 1.0
    %v87 = vmul.f32 %v86, %v81
    %v88 = vand.u32 2147483647, %v81
    %vm89 = vcmp.lt.f32.partialorder %v88, 0.0004427343
    %v90 = vsel %vm89, %v87, %v84
    %v91 = vadd.f32 %v77, %v90
    %v92 = vsel %vm73, %v91, 0.0
    %v93 = vld [vmem:[#allocation7] sm:$0x1]
    %v94 = vrot.slane %v74, 4
    %v95 = vadd.f32 %v74, %v94
    %v96 = vrot.slane %v95, 2
    %v97 = vadd.f32 %v95, %v96
    %v98 = vrot.slane %v97, 1
    %v99 = vadd.f32 %v97, %v98
    %v100 = vadd.f32 %v93, %v99
    %101 = vst [vmem:[#allocation7] sm:$0x1] %v100
    %v102 = vld [vmem:[#allocation8] sm:$0x1]
    %v103 = vrot.slane %v92, 4
    %v104 = vadd.f32 %v92, %v103
    %v105 = vrot.slane %v104, 2
    %v106 = vadd.f32 %v104, %v105
    %v107 = vrot.slane %v106, 1
    %v108 = vadd.f32 %v106, %v107
    %v109 = vadd.f32 %v102, %v108
    %110 = vst [vmem:[#allocation8] sm:$0x1] %v109
    // Predicated region
    $region22: #{tpu_custom_call.1} parent=1 // pred_check
      _
    $region23: #{tpu_custom_call.1} parent=1 // pred_check_branch
      %112 = sbr.rel (0) target = $region25
    $region24: #{tpu_custom_call.1} parent=1 // pred_region
      %s114 = ssub.s32 16, 16
      %115 = vsyncadd [#allocation4], %s114
      %s117 = sshll.u32 [#allocation7], 4
      %s118 = int_to_ptr.vmem [resolvable:$true] %s117
      %120 = dma.vmem_to_hbm [thread:$0]  %s118, 16, %s2, [#allocation4]
    $region25: #{tpu_custom_call.1} parent=1 // pred_fallthru
      _
    // Predicated region
    $region26: #{tpu_custom_call.1} parent=1 // pred_check
      _
    $region27: #{tpu_custom_call.1} parent=1 // pred_check_branch
      %122 = sbr.rel (0) target = $region29
    $region28: #{tpu_custom_call.1} parent=1 // pred_region
      %s124 = ssub.s32 16, 16
      %125 = vsyncadd [#allocation9], %s124
      %s127 = sshll.u32 [#allocation8], 4
      %s128 = int_to_ptr.vmem [resolvable:$true] %s127
      %130 = dma.vmem_to_hbm [thread:$0]  %s128, 16, %s3, [#allocation9]
    $region29: #{tpu_custom_call.1} parent=1 // pred_fallthru
      _
    // Predicated region
    $region30: #{tpu_custom_call.1} parent=1 // pred_check
      _
    $region31: #{tpu_custom_call.1} parent=1 // pred_check_branch
      %132 = sbr.rel (0) target = $region33
    $region32: #{tpu_custom_call.1} parent=1 // pred_region
      %133 = dma.done [#allocation4], 16
    $region33: #{tpu_custom_call.1} parent=1 // pred_fallthru
      _
    // Predicated region
    $region34: #{tpu_custom_call.1} parent=1 // pred_check
      _
    $region35: #{tpu_custom_call.1} parent=1 // pred_check_branch
      %135 = sbr.rel (0) target = $region37
    $region36: #{tpu_custom_call.1} parent=1 // pred_region
      %136 = dma.done [#allocation9], 16
    $region37: #{tpu_custom_call.1} parent=1 // pred_fallthru
      _
    %137 = vsyncpa [#allocation3], 1
    %138 = vsyncpa [#allocation6], 1
    %139 = vsyncpa [#allocation4], 1
    %140 = vsyncpa [#allocation9], 1

</llo_original>
